<compile_context>
chip_gen: v6e
topology: v6e:2x2x1
jax: 0.10.0
libtpu: 0.0.40
codegen_flags: <defaults>
</compile_context>

<pallas_src>
import jax
import jax.numpy as jnp
from jax.experimental import pallas as pl
from jax.experimental.pallas import tpu as pltpu

# ---- hyperparameters (module-level globals in the original script) ----
vocab_size = 32
embedding_dim = 32
feed_num = 64
num_hidden_layers = 2

LN_EPS = 1e-5          # torch.nn.LayerNorm default
_N_VEC_ROWS = 9        # b_att, b1, b2, g1, be1, gff, bff, g2, be2
_WSLAB = 128           # lane-aligned weight slab side


def _gelu(x):
    # Exact (erf-based) GELU: torch.nn.GELU() default (approximate='none').
    return 0.5 * x * (1.0 + jax.lax.erf(x * jnp.float32(0.7071067811865476)))


def _layernorm(x, gamma, beta):
    # LayerNorm over the last dim, biased variance, eps=1e-5 (PyTorch semantics).
    mean = jnp.mean(x, axis=-1, keepdims=True)
    var = jnp.mean(jnp.square(x - mean), axis=-1, keepdims=True)
    return (x - mean) * jax.lax.rsqrt(var + LN_EPS) * gamma + beta


def fused_kernel(ids_ref, tab_ref, w_ref, v_ref, o_ref):
    """Entire forward pass: embedding gather + all encoder Blocks, unrolled."""
    n = ids_ref.shape[0]
    v, d = tab_ref.shape
    f = v_ref.shape[2]
    n_layers = w_ref.shape[0]          # static at trace time

    # ---- fused embedding + positional lookup (one-hot matmul gather) ----
    ids = ids_ref[...]                                            # [N, 1] int32
    lane_iota = jax.lax.broadcasted_iota(jnp.int32, (n, v), 1)    # [N, V]
    onehot = (lane_iota == ids).astype(jnp.float32)               # [N, V]
    x = jnp.dot(onehot, tab_ref[...],
                preferred_element_type=jnp.float32)               # [N, D]

    # ---- encoder Blocks, statically unrolled; x lives in vregs throughout ----
    for l in range(n_layers):
        w = w_ref[l]                   # [128, 128]  lane-aligned slab
        vs = v_ref[l]                  # [9, F]

        # All sub-matrix slices start at lane 0 (sublane-only offsets).
        w_att = w[0:d, 0:d]            # rows  0: 32, cols 0:32
        w1 = w[d:2 * d, 0:f]           # rows 32: 64, cols 0:64
        w2 = w[2 * d:2 * d + f, 0:d]   # rows 64:128, cols 0:32

        b_att = vs[0:1, 0:d]
        b1 = vs[1:2, 0:f]
        b2 = vs[2:3, 0:d]
        g1 = vs[3:4, 0:d]
        be1 = vs[4:5, 0:d]
        gff = vs[5:6, 0:d]
        bff = vs[6:7, 0:d]
        g2 = vs[7:8, 0:d]
        be2 = vs[8:9, 0:d]

        # Multi_Head_Attention: gelu(linear(x))
        att = _gelu(jnp.dot(x, w_att, preferred_element_type=jnp.float32) + b_att)

        # norm1, residual 1
        adn1 = x + _layernorm(att, g1, be1)

        # Feed_Forward: linear1 -> gelu -> linear2 -> layernorm -> dropout
        h = _gelu(jnp.dot(adn1, w1, preferred_element_type=jnp.float32) + b1)
        ff = jnp.dot(h, w2, preferred_element_type=jnp.float32) + b2
        ff = _layernorm(ff, gff, bff)
        # TODO(synk): Dropout(0.1) is identity in eval mode; training-mode dropout not modeled.

        # norm2, residual 2
        x = adn1 + _layernorm(ff, g2, be2)

    o_ref[...] = x


def my_transformer_forward(inputs, packed):
    """inputs: [B, S] int32 token ids.  packed: (table, wslab, vslab)."""
    table, wslab, vslab = packed
    b, s = inputs.shape
    n = b * s
    d, f, vsz = embedding_dim, feed_num, vocab_size
    n_layers = wslab.shape[0]
    ids = inputs.reshape(n, 1).astype(jnp.int32)

    flops = 2 * n * vsz * d + 2 * n_layers * n * (d * d + 2 * d * f)
    bytes_accessed = 4 * (n + vsz * d
                          + n_layers * (_WSLAB * _WSLAB + _N_VEC_ROWS * f)
                          + n * d)
    cost = pl.CostEstimate(flops=flops,
                           transcendentals=n_layers * n * (d + f),
                           bytes_accessed=bytes_accessed)

    vmem = pl.BlockSpec(memory_space=pltpu.MemorySpace.VMEM)
    out = pl.pallas_call(
        fused_kernel,
        out_shape=jax.ShapeDtypeStruct((n, d), jnp.float32),
        in_specs=[vmem, vmem, vmem, vmem],     # whole arrays resident in VMEM
        out_specs=vmem,
        cost_estimate=cost,
    )(ids, table, wslab, vslab)
    return out.reshape(b, s, d)


def init_params(key):
    """Deterministic synthetic parameters (shapes match the nn.Module)."""
    keys = jax.random.split(key, 3 + num_hidden_layers)
    k_emb, k_pos = keys[0], keys[1]
    params = {
        "emb": 0.02 * jax.random.normal(k_emb, (vocab_size, embedding_dim), jnp.float32),
        "pos": 0.02 * jax.random.normal(k_pos, (vocab_size, embedding_dim), jnp.float32),
        "layers": [],
    }
    for li in range(num_hidden_layers):
        lk = jax.random.split(keys[3 + li], 4)
        d, f = embedding_dim, feed_num
        layer = {
            # Multi_Head_Attention: Linear(D, D)
            "w_att": 0.02 * jax.random.normal(lk[0], (d, d), jnp.float32),
            "b_att": jnp.zeros((d,), jnp.float32),
            # Norm1
            "g1": jnp.ones((d,), jnp.float32),
            "be1": jnp.zeros((d,), jnp.float32),
            # Feed_Forward
            "w1": 0.02 * jax.random.normal(lk[1], (d, f), jnp.float32),
            "b1": jnp.zeros((f,), jnp.float32),
            "w2": 0.02 * jax.random.normal(lk[2], (f, d), jnp.float32),
            "b2": jnp.zeros((d,), jnp.float32),
            "gff": jnp.ones((d,), jnp.float32),
            "bff": jnp.zeros((d,), jnp.float32),
            # Norm2
            "g2": jnp.ones((d,), jnp.float32),
            "be2": jnp.zeros((d,), jnp.float32),
        }
        params["layers"].append(layer)
    return params


def pack_params(params):
    """Pre-sum emb+pos; pack per-layer params into a lane-aligned weight slab
    [L, 128, 128] (every sub-matrix starts at lane 0) and a bias/gain slab
    [L, 9, F]."""
    d, f = embedding_dim, feed_num
    table = params["emb"] + params["pos"]                          # [V, D]

    def pad_row(vec, width):
        vec = vec.reshape(-1)
        return jnp.pad(vec, (0, width - vec.shape[0]))

    wslabs, vslabs = [], []
    for lp in params["layers"]:
        w = jnp.zeros((_WSLAB, _WSLAB), jnp.float32)
        w = w.at[0:d, 0:d].set(lp["w_att"])                        # rows  0: 32
        w = w.at[d:2 * d, 0:f].set(lp["w1"])                       # rows 32: 64
        w = w.at[2 * d:2 * d + f, 0:d].set(lp["w2"])               # rows 64:128
        wslabs.append(w)
        vslabs.append(jnp.stack([
            pad_row(lp["b_att"], f), pad_row(lp["b1"], f), pad_row(lp["b2"], f),
            pad_row(lp["g1"], f), pad_row(lp["be1"], f), pad_row(lp["gff"], f),
            pad_row(lp["bff"], f), pad_row(lp["g2"], f), pad_row(lp["be2"], f),
        ], axis=0))                                                # [9, F]
    return table, jnp.stack(wslabs, 0), jnp.stack(vslabs, 0)


def _reference_forward(inputs, params):
    """Pure-JAX reference (same math as the nn.Module) for a sanity check."""
    b, s = inputs.shape
    x = (jnp.take(params["emb"], inputs, axis=0)
         + jnp.take(params["pos"], inputs, axis=0)).reshape(b * s, embedding_dim)
    for lp in params["layers"]:
        att = _gelu(x @ lp["w_att"] + lp["b_att"])
        adn1 = x + _layernorm(att, lp["g1"], lp["be1"])
        h = _gelu(adn1 @ lp["w1"] + lp["b1"])
        ff = _layernorm(h @ lp["w2"] + lp["b2"], lp["gff"], lp["bff"])
        x = adn1 + _layernorm(ff, lp["g2"], lp["be2"])
    return x.reshape(b, s, embedding_dim)


if __name__ == "__main__":
    key = jax.random.PRNGKey(0)
    k_param, k_in = jax.random.split(key)
    params = init_params(k_param)
    packed = pack_params(params)

    batch, seq = 2, 8
    inputs = jax.random.randint(k_in, (batch, seq), 0, vocab_size, dtype=jnp.int32)

    out = my_transformer_forward(inputs, packed)
    jax.block_until_ready(out)
    assert out.shape == (batch, seq, embedding_dim)

    ref = _reference_forward(inputs, params)
    assert jnp.allclose(out, ref, atol=1e-2, rtol=1e-2), "kernel/reference mismatch"

    print("KERNEL_OK")
</pallas_src>

<mosaic_0001>
module attributes {stable_mosaic.version = 11 : i64} {
  func.func @fused_kernel(%arg0: memref<16x1xi32, #tpu.memory_space<vmem>>, %arg1: memref<32x32xf32, #tpu.memory_space<vmem>>, %arg2: memref<2x128x128xf32, #tpu.memory_space<vmem>>, %arg3: memref<2x9x64xf32, #tpu.memory_space<vmem>>, %arg4: memref<16x32xf32, #tpu.memory_space<vmem>>) attributes {dimension_semantics = [], scalar_prefetch = 0 : i64, scratch_operands = 0 : i64, tpu.core_type = #tpu.core_type<tc>} {
    %c0 = arith.constant 0 : index
    %c0_0 = arith.constant 0 : index
    %0 = vector.load %arg0[%c0, %c0_0] : memref<16x1xi32, #tpu.memory_space<vmem>>, vector<16x1xi32>
    %1 = tpu.iota {dimensions = array<i32: 1>} : vector<16x32xi32>
    %2 = vector.broadcast %0 : vector<16x1xi32> to vector<16x32xi32>
    %3 = arith.cmpi eq, %1, %2 : vector<16x32xi32>
    %4 = arith.extui %3 : vector<16x32xi1> to vector<16x32xi32>
    %5 = arith.sitofp %4 : vector<16x32xi32> to vector<16x32xf32>
    %c0_1 = arith.constant 0 : index
    %c0_2 = arith.constant 0 : index
    %6 = vector.load %arg1[%c0_1, %c0_2] : memref<32x32xf32, #tpu.memory_space<vmem>>, vector<32x32xf32>
    %cst = arith.constant dense<0.000000e+00> : vector<16x32xf32>
    %7 = tpu.matmul %5, %6, %cst {dimension_numbers = #tpu.dot_dimension_numbers<[1], [0], [0], [1], [0, 0, 1, 1], [], []>} : vector<16x32xf32>, vector<32x32xf32>, vector<16x32xf32> -> vector<16x32xf32>
    %c0_3 = arith.constant 0 : index
    %c0_4 = arith.constant 0 : index
    %c0_5 = arith.constant 0 : index
    %8 = vector.load %arg2[%c0_3, %c0_4, %c0_5] : memref<2x128x128xf32, #tpu.memory_space<vmem>>, vector<1x128x128xf32>
    %9 = vector.shape_cast %8 : vector<1x128x128xf32> to vector<128x128xf32>
    %c0_6 = arith.constant 0 : index
    %c0_7 = arith.constant 0 : index
    %c0_8 = arith.constant 0 : index
    %10 = vector.load %arg3[%c0_6, %c0_7, %c0_8] : memref<2x9x64xf32, #tpu.memory_space<vmem>>, vector<1x9x64xf32>
    %11 = vector.shape_cast %10 : vector<1x9x64xf32> to vector<9x64xf32>
    %12 = vector.extract_strided_slice %9 {offsets = [0, 0], sizes = [32, 32], strides = [1, 1]} : vector<128x128xf32> to vector<32x32xf32>
    %13 = vector.extract_strided_slice %9 {offsets = [32, 0], sizes = [32, 64], strides = [1, 1]} : vector<128x128xf32> to vector<32x64xf32>
    %14 = vector.extract_strided_slice %9 {offsets = [64, 0], sizes = [64, 32], strides = [1, 1]} : vector<128x128xf32> to vector<64x32xf32>
    %15 = vector.extract_strided_slice %11 {offsets = [0, 0], sizes = [1, 32], strides = [1, 1]} : vector<9x64xf32> to vector<1x32xf32>
    %16 = vector.extract_strided_slice %11 {offsets = [1, 0], sizes = [1, 64], strides = [1, 1]} : vector<9x64xf32> to vector<1x64xf32>
    %17 = vector.extract_strided_slice %11 {offsets = [2, 0], sizes = [1, 32], strides = [1, 1]} : vector<9x64xf32> to vector<1x32xf32>
    %18 = vector.extract_strided_slice %11 {offsets = [3, 0], sizes = [1, 32], strides = [1, 1]} : vector<9x64xf32> to vector<1x32xf32>
    %19 = vector.extract_strided_slice %11 {offsets = [4, 0], sizes = [1, 32], strides = [1, 1]} : vector<9x64xf32> to vector<1x32xf32>
    %20 = vector.extract_strided_slice %11 {offsets = [5, 0], sizes = [1, 32], strides = [1, 1]} : vector<9x64xf32> to vector<1x32xf32>
    %21 = vector.extract_strided_slice %11 {offsets = [6, 0], sizes = [1, 32], strides = [1, 1]} : vector<9x64xf32> to vector<1x32xf32>
    %22 = vector.extract_strided_slice %11 {offsets = [7, 0], sizes = [1, 32], strides = [1, 1]} : vector<9x64xf32> to vector<1x32xf32>
    %23 = vector.extract_strided_slice %11 {offsets = [8, 0], sizes = [1, 32], strides = [1, 1]} : vector<9x64xf32> to vector<1x32xf32>
    %cst_9 = arith.constant dense<0.000000e+00> : vector<16x32xf32>
    %24 = tpu.matmul %7, %12, %cst_9 {dimension_numbers = #tpu.dot_dimension_numbers<[1], [0], [0], [1], [0, 0, 1, 1], [], []>} : vector<16x32xf32>, vector<32x32xf32>, vector<16x32xf32> -> vector<16x32xf32>
    %25 = vector.broadcast %15 : vector<1x32xf32> to vector<16x32xf32>
    %26 = arith.addf %24, %25 : vector<16x32xf32>
    %cst_10 = arith.constant 5.000000e-01 : f32
    %27 = vector.broadcast %cst_10 : f32 to vector<16x32xf32>
    %28 = arith.mulf %27, %26 : vector<16x32xf32>
    %cst_11 = arith.constant 0.707106769 : f32
    %29 = vector.broadcast %cst_11 : f32 to vector<16x32xf32>
    %30 = arith.mulf %26, %29 : vector<16x32xf32>
    %31 = math.erf %30 : vector<16x32xf32>
    %cst_12 = arith.constant 1.000000e+00 : f32
    %32 = vector.broadcast %cst_12 : f32 to vector<16x32xf32>
    %33 = arith.addf %32, %31 : vector<16x32xf32>
    %34 = arith.mulf %28, %33 : vector<16x32xf32>
    %cst_13 = arith.constant dense<0.000000e+00> : vector<16xf32>
    %35 = vector.multi_reduction <add>, %34, %cst_13 [1] : vector<16x32xf32> to vector<16xf32>
    %36 = vector.shape_cast %35 : vector<16xf32> to vector<16x1xf32>
    %cst_14 = arith.constant 3.200000e+01 : f32
    %37 = vector.broadcast %cst_14 : f32 to vector<16x1xf32>
    %38 = arith.divf %36, %37 : vector<16x1xf32>
    %39 = vector.broadcast %38 : vector<16x1xf32> to vector<16x32xf32>
    %40 = arith.subf %34, %39 : vector<16x32xf32>
    %41 = arith.mulf %40, %40 : vector<16x32xf32>
    %cst_15 = arith.constant dense<0.000000e+00> : vector<16xf32>
    %42 = vector.multi_reduction <add>, %41, %cst_15 [1] : vector<16x32xf32> to vector<16xf32>
    %43 = vector.shape_cast %42 : vector<16xf32> to vector<16x1xf32>
    %cst_16 = arith.constant 3.200000e+01 : f32
    %44 = vector.broadcast %cst_16 : f32 to vector<16x1xf32>
    %45 = arith.divf %43, %44 : vector<16x1xf32>
    %46 = vector.broadcast %38 : vector<16x1xf32> to vector<16x32xf32>
    %47 = arith.subf %34, %46 : vector<16x32xf32>
    %cst_17 = arith.constant 9.99999974E-6 : f32
    %48 = vector.broadcast %cst_17 : f32 to vector<16x1xf32>
    %49 = arith.addf %45, %48 : vector<16x1xf32>
    %50 = math.rsqrt %49 : vector<16x1xf32>
    %51 = vector.broadcast %50 : vector<16x1xf32> to vector<16x32xf32>
    %52 = arith.mulf %47, %51 : vector<16x32xf32>
    %53 = vector.broadcast %18 : vector<1x32xf32> to vector<16x32xf32>
    %54 = arith.mulf %52, %53 : vector<16x32xf32>
    %55 = vector.broadcast %19 : vector<1x32xf32> to vector<16x32xf32>
    %56 = arith.addf %54, %55 : vector<16x32xf32>
    %57 = arith.addf %7, %56 : vector<16x32xf32>
    %cst_18 = arith.constant dense<0.000000e+00> : vector<16x64xf32>
    %58 = tpu.matmul %57, %13, %cst_18 {dimension_numbers = #tpu.dot_dimension_numbers<[1], [0], [0], [1], [0, 0, 1, 1], [], []>} : vector<16x32xf32>, vector<32x64xf32>, vector<16x64xf32> -> vector<16x64xf32>
    %59 = vector.broadcast %16 : vector<1x64xf32> to vector<16x64xf32>
    %60 = arith.addf %58, %59 : vector<16x64xf32>
    %cst_19 = arith.constant 5.000000e-01 : f32
    %61 = vector.broadcast %cst_19 : f32 to vector<16x64xf32>
    %62 = arith.mulf %61, %60 : vector<16x64xf32>
    %cst_20 = arith.constant 0.707106769 : f32
    %63 = vector.broadcast %cst_20 : f32 to vector<16x64xf32>
    %64 = arith.mulf %60, %63 : vector<16x64xf32>
    %65 = math.erf %64 : vector<16x64xf32>
    %cst_21 = arith.constant 1.000000e+00 : f32
    %66 = vector.broadcast %cst_21 : f32 to vector<16x64xf32>
    %67 = arith.addf %66, %65 : vector<16x64xf32>
    %68 = arith.mulf %62, %67 : vector<16x64xf32>
    %cst_22 = arith.constant dense<0.000000e+00> : vector<16x32xf32>
    %69 = tpu.matmul %68, %14, %cst_22 {dimension_numbers = #tpu.dot_dimension_numbers<[1], [0], [0], [1], [0, 0, 1, 1], [], []>} : vector<16x64xf32>, vector<64x32xf32>, vector<16x32xf32> -> vector<16x32xf32>
    %70 = vector.broadcast %17 : vector<1x32xf32> to vector<16x32xf32>
    %71 = arith.addf %69, %70 : vector<16x32xf32>
    %cst_23 = arith.constant dense<0.000000e+00> : vector<16xf32>
    %72 = vector.multi_reduction <add>, %71, %cst_23 [1] : vector<16x32xf32> to vector<16xf32>
    %73 = vector.shape_cast %72 : vector<16xf32> to vector<16x1xf32>
    %cst_24 = arith.constant 3.200000e+01 : f32
    %74 = vector.broadcast %cst_24 : f32 to vector<16x1xf32>
    %75 = arith.divf %73, %74 : vector<16x1xf32>
    %76 = vector.broadcast %75 : vector<16x1xf32> to vector<16x32xf32>
    %77 = arith.subf %71, %76 : vector<16x32xf32>
    %78 = arith.mulf %77, %77 : vector<16x32xf32>
    %cst_25 = arith.constant dense<0.000000e+00> : vector<16xf32>
    %79 = vector.multi_reduction <add>, %78, %cst_25 [1] : vector<16x32xf32> to vector<16xf32>
    %80 = vector.shape_cast %79 : vector<16xf32> to vector<16x1xf32>
    %cst_26 = arith.constant 3.200000e+01 : f32
    %81 = vector.broadcast %cst_26 : f32 to vector<16x1xf32>
    %82 = arith.divf %80, %81 : vector<16x1xf32>
    %83 = vector.broadcast %75 : vector<16x1xf32> to vector<16x32xf32>
    %84 = arith.subf %71, %83 : vector<16x32xf32>
    %cst_27 = arith.constant 9.99999974E-6 : f32
    %85 = vector.broadcast %cst_27 : f32 to vector<16x1xf32>
    %86 = arith.addf %82, %85 : vector<16x1xf32>
    %87 = math.rsqrt %86 : vector<16x1xf32>
    %88 = vector.broadcast %87 : vector<16x1xf32> to vector<16x32xf32>
    %89 = arith.mulf %84, %88 : vector<16x32xf32>
    %90 = vector.broadcast %20 : vector<1x32xf32> to vector<16x32xf32>
    %91 = arith.mulf %89, %90 : vector<16x32xf32>
    %92 = vector.broadcast %21 : vector<1x32xf32> to vector<16x32xf32>
    %93 = arith.addf %91, %92 : vector<16x32xf32>
    %cst_28 = arith.constant dense<0.000000e+00> : vector<16xf32>
    %94 = vector.multi_reduction <add>, %93, %cst_28 [1] : vector<16x32xf32> to vector<16xf32>
    %95 = vector.shape_cast %94 : vector<16xf32> to vector<16x1xf32>
    %cst_29 = arith.constant 3.200000e+01 : f32
    %96 = vector.broadcast %cst_29 : f32 to vector<16x1xf32>
    %97 = arith.divf %95, %96 : vector<16x1xf32>
    %98 = vector.broadcast %97 : vector<16x1xf32> to vector<16x32xf32>
    %99 = arith.subf %93, %98 : vector<16x32xf32>
    %100 = arith.mulf %99, %99 : vector<16x32xf32>
    %cst_30 = arith.constant dense<0.000000e+00> : vector<16xf32>
    %101 = vector.multi_reduction <add>, %100, %cst_30 [1] : vector<16x32xf32> to vector<16xf32>
    %102 = vector.shape_cast %101 : vector<16xf32> to vector<16x1xf32>
    %cst_31 = arith.constant 3.200000e+01 : f32
    %103 = vector.broadcast %cst_31 : f32 to vector<16x1xf32>
    %104 = arith.divf %102, %103 : vector<16x1xf32>
    %105 = vector.broadcast %97 : vector<16x1xf32> to vector<16x32xf32>
    %106 = arith.subf %93, %105 : vector<16x32xf32>
    %cst_32 = arith.constant 9.99999974E-6 : f32
    %107 = vector.broadcast %cst_32 : f32 to vector<16x1xf32>
    %108 = arith.addf %104, %107 : vector<16x1xf32>
    %109 = math.rsqrt %108 : vector<16x1xf32>
    %110 = vector.broadcast %109 : vector<16x1xf32> to vector<16x32xf32>
    %111 = arith.mulf %106, %110 : vector<16x32xf32>
    %112 = vector.broadcast %22 : vector<1x32xf32> to vector<16x32xf32>
    %113 = arith.mulf %111, %112 : vector<16x32xf32>
    %114 = vector.broadcast %23 : vector<1x32xf32> to vector<16x32xf32>
    %115 = arith.addf %113, %114 : vector<16x32xf32>
    %116 = arith.addf %57, %115 : vector<16x32xf32>
    %c1 = arith.constant 1 : index
    %c0_33 = arith.constant 0 : index
    %c0_34 = arith.constant 0 : index
    %117 = vector.load %arg2[%c1, %c0_33, %c0_34] : memref<2x128x128xf32, #tpu.memory_space<vmem>>, vector<1x128x128xf32>
    %118 = vector.shape_cast %117 : vector<1x128x128xf32> to vector<128x128xf32>
    %c1_35 = arith.constant 1 : index
    %c0_36 = arith.constant 0 : index
    %c0_37 = arith.constant 0 : index
    %119 = vector.load %arg3[%c1_35, %c0_36, %c0_37] : memref<2x9x64xf32, #tpu.memory_space<vmem>>, vector<1x9x64xf32>
    %120 = vector.shape_cast %119 : vector<1x9x64xf32> to vector<9x64xf32>
    %121 = vector.extract_strided_slice %118 {offsets = [0, 0], sizes = [32, 32], strides = [1, 1]} : vector<128x128xf32> to vector<32x32xf32>
    %122 = vector.extract_strided_slice %118 {offsets = [32, 0], sizes = [32, 64], strides = [1, 1]} : vector<128x128xf32> to vector<32x64xf32>
    %123 = vector.extract_strided_slice %118 {offsets = [64, 0], sizes = [64, 32], strides = [1, 1]} : vector<128x128xf32> to vector<64x32xf32>
    %124 = vector.extract_strided_slice %120 {offsets = [0, 0], sizes = [1, 32], strides = [1, 1]} : vector<9x64xf32> to vector<1x32xf32>
    %125 = vector.extract_strided_slice %120 {offsets = [1, 0], sizes = [1, 64], strides = [1, 1]} : vector<9x64xf32> to vector<1x64xf32>
    %126 = vector.extract_strided_slice %120 {offsets = [2, 0], sizes = [1, 32], strides = [1, 1]} : vector<9x64xf32> to vector<1x32xf32>
    %127 = vector.extract_strided_slice %120 {offsets = [3, 0], sizes = [1, 32], strides = [1, 1]} : vector<9x64xf32> to vector<1x32xf32>
    %128 = vector.extract_strided_slice %120 {offsets = [4, 0], sizes = [1, 32], strides = [1, 1]} : vector<9x64xf32> to vector<1x32xf32>
    %129 = vector.extract_strided_slice %120 {offsets = [5, 0], sizes = [1, 32], strides = [1, 1]} : vector<9x64xf32> to vector<1x32xf32>
    %130 = vector.extract_strided_slice %120 {offsets = [6, 0], sizes = [1, 32], strides = [1, 1]} : vector<9x64xf32> to vector<1x32xf32>
    %131 = vector.extract_strided_slice %120 {offsets = [7, 0], sizes = [1, 32], strides = [1, 1]} : vector<9x64xf32> to vector<1x32xf32>
    %132 = vector.extract_strided_slice %120 {offsets = [8, 0], sizes = [1, 32], strides = [1, 1]} : vector<9x64xf32> to vector<1x32xf32>
    %cst_38 = arith.constant dense<0.000000e+00> : vector<16x32xf32>
    %133 = tpu.matmul %116, %121, %cst_38 {dimension_numbers = #tpu.dot_dimension_numbers<[1], [0], [0], [1], [0, 0, 1, 1], [], []>} : vector<16x32xf32>, vector<32x32xf32>, vector<16x32xf32> -> vector<16x32xf32>
    %134 = vector.broadcast %124 : vector<1x32xf32> to vector<16x32xf32>
    %135 = arith.addf %133, %134 : vector<16x32xf32>
    %cst_39 = arith.constant 5.000000e-01 : f32
    %136 = vector.broadcast %cst_39 : f32 to vector<16x32xf32>
    %137 = arith.mulf %136, %135 : vector<16x32xf32>
    %cst_40 = arith.constant 0.707106769 : f32
    %138 = vector.broadcast %cst_40 : f32 to vector<16x32xf32>
    %139 = arith.mulf %135, %138 : vector<16x32xf32>
    %140 = math.erf %139 : vector<16x32xf32>
    %cst_41 = arith.constant 1.000000e+00 : f32
    %141 = vector.broadcast %cst_41 : f32 to vector<16x32xf32>
    %142 = arith.addf %141, %140 : vector<16x32xf32>
    %143 = arith.mulf %137, %142 : vector<16x32xf32>
    %cst_42 = arith.constant dense<0.000000e+00> : vector<16xf32>
    %144 = vector.multi_reduction <add>, %143, %cst_42 [1] : vector<16x32xf32> to vector<16xf32>
    %145 = vector.shape_cast %144 : vector<16xf32> to vector<16x1xf32>
    %cst_43 = arith.constant 3.200000e+01 : f32
    %146 = vector.broadcast %cst_43 : f32 to vector<16x1xf32>
    %147 = arith.divf %145, %146 : vector<16x1xf32>
    %148 = vector.broadcast %147 : vector<16x1xf32> to vector<16x32xf32>
    %149 = arith.subf %143, %148 : vector<16x32xf32>
    %150 = arith.mulf %149, %149 : vector<16x32xf32>
    %cst_44 = arith.constant dense<0.000000e+00> : vector<16xf32>
    %151 = vector.multi_reduction <add>, %150, %cst_44 [1] : vector<16x32xf32> to vector<16xf32>
    %152 = vector.shape_cast %151 : vector<16xf32> to vector<16x1xf32>
    %cst_45 = arith.constant 3.200000e+01 : f32
    %153 = vector.broadcast %cst_45 : f32 to vector<16x1xf32>
    %154 = arith.divf %152, %153 : vector<16x1xf32>
    %155 = vector.broadcast %147 : vector<16x1xf32> to vector<16x32xf32>
    %156 = arith.subf %143, %155 : vector<16x32xf32>
    %cst_46 = arith.constant 9.99999974E-6 : f32
    %157 = vector.broadcast %cst_46 : f32 to vector<16x1xf32>
    %158 = arith.addf %154, %157 : vector<16x1xf32>
    %159 = math.rsqrt %158 : vector<16x1xf32>
    %160 = vector.broadcast %159 : vector<16x1xf32> to vector<16x32xf32>
    %161 = arith.mulf %156, %160 : vector<16x32xf32>
    %162 = vector.broadcast %127 : vector<1x32xf32> to vector<16x32xf32>
    %163 = arith.mulf %161, %162 : vector<16x32xf32>
    %164 = vector.broadcast %128 : vector<1x32xf32> to vector<16x32xf32>
    %165 = arith.addf %163, %164 : vector<16x32xf32>
    %166 = arith.addf %116, %165 : vector<16x32xf32>
    %cst_47 = arith.constant dense<0.000000e+00> : vector<16x64xf32>
    %167 = tpu.matmul %166, %122, %cst_47 {dimension_numbers = #tpu.dot_dimension_numbers<[1], [0], [0], [1], [0, 0, 1, 1], [], []>} : vector<16x32xf32>, vector<32x64xf32>, vector<16x64xf32> -> vector<16x64xf32>
    %168 = vector.broadcast %125 : vector<1x64xf32> to vector<16x64xf32>
    %169 = arith.addf %167, %168 : vector<16x64xf32>
    %cst_48 = arith.constant 5.000000e-01 : f32
    %170 = vector.broadcast %cst_48 : f32 to vector<16x64xf32>
    %171 = arith.mulf %170, %169 : vector<16x64xf32>
    %cst_49 = arith.constant 0.707106769 : f32
    %172 = vector.broadcast %cst_49 : f32 to vector<16x64xf32>
    %173 = arith.mulf %169, %172 : vector<16x64xf32>
    %174 = math.erf %173 : vector<16x64xf32>
    %cst_50 = arith.constant 1.000000e+00 : f32
    %175 = vector.broadcast %cst_50 : f32 to vector<16x64xf32>
    %176 = arith.addf %175, %174 : vector<16x64xf32>
    %177 = arith.mulf %171, %176 : vector<16x64xf32>
    %cst_51 = arith.constant dense<0.000000e+00> : vector<16x32xf32>
    %178 = tpu.matmul %177, %123, %cst_51 {dimension_numbers = #tpu.dot_dimension_numbers<[1], [0], [0], [1], [0, 0, 1, 1], [], []>} : vector<16x64xf32>, vector<64x32xf32>, vector<16x32xf32> -> vector<16x32xf32>
    %179 = vector.broadcast %126 : vector<1x32xf32> to vector<16x32xf32>
    %180 = arith.addf %178, %179 : vector<16x32xf32>
    %cst_52 = arith.constant dense<0.000000e+00> : vector<16xf32>
    %181 = vector.multi_reduction <add>, %180, %cst_52 [1] : vector<16x32xf32> to vector<16xf32>
    %182 = vector.shape_cast %181 : vector<16xf32> to vector<16x1xf32>
    %cst_53 = arith.constant 3.200000e+01 : f32
    %183 = vector.broadcast %cst_53 : f32 to vector<16x1xf32>
    %184 = arith.divf %182, %183 : vector<16x1xf32>
    %185 = vector.broadcast %184 : vector<16x1xf32> to vector<16x32xf32>
    %186 = arith.subf %180, %185 : vector<16x32xf32>
    %187 = arith.mulf %186, %186 : vector<16x32xf32>
    %cst_54 = arith.constant dense<0.000000e+00> : vector<16xf32>
    %188 = vector.multi_reduction <add>, %187, %cst_54 [1] : vector<16x32xf32> to vector<16xf32>
    %189 = vector.shape_cast %188 : vector<16xf32> to vector<16x1xf32>
    %cst_55 = arith.constant 3.200000e+01 : f32
    %190 = vector.broadcast %cst_55 : f32 to vector<16x1xf32>
    %191 = arith.divf %189, %190 : vector<16x1xf32>
    %192 = vector.broadcast %184 : vector<16x1xf32> to vector<16x32xf32>
    %193 = arith.subf %180, %192 : vector<16x32xf32>
    %cst_56 = arith.constant 9.99999974E-6 : f32
    %194 = vector.broadcast %cst_56 : f32 to vector<16x1xf32>
    %195 = arith.addf %191, %194 : vector<16x1xf32>
    %196 = math.rsqrt %195 : vector<16x1xf32>
    %197 = vector.broadcast %196 : vector<16x1xf32> to vector<16x32xf32>
    %198 = arith.mulf %193, %197 : vector<16x32xf32>
    %199 = vector.broadcast %129 : vector<1x32xf32> to vector<16x32xf32>
    %200 = arith.mulf %198, %199 : vector<16x32xf32>
    %201 = vector.broadcast %130 : vector<1x32xf32> to vector<16x32xf32>
    %202 = arith.addf %200, %201 : vector<16x32xf32>
    %cst_57 = arith.constant dense<0.000000e+00> : vector<16xf32>
    %203 = vector.multi_reduction <add>, %202, %cst_57 [1] : vector<16x32xf32> to vector<16xf32>
    %204 = vector.shape_cast %203 : vector<16xf32> to vector<16x1xf32>
    %cst_58 = arith.constant 3.200000e+01 : f32
    %205 = vector.broadcast %cst_58 : f32 to vector<16x1xf32>
    %206 = arith.divf %204, %205 : vector<16x1xf32>
    %207 = vector.broadcast %206 : vector<16x1xf32> to vector<16x32xf32>
    %208 = arith.subf %202, %207 : vector<16x32xf32>
    %209 = arith.mulf %208, %208 : vector<16x32xf32>
    %cst_59 = arith.constant dense<0.000000e+00> : vector<16xf32>
    %210 = vector.multi_reduction <add>, %209, %cst_59 [1] : vector<16x32xf32> to vector<16xf32>
    %211 = vector.shape_cast %210 : vector<16xf32> to vector<16x1xf32>
    %cst_60 = arith.constant 3.200000e+01 : f32
    %212 = vector.broadcast %cst_60 : f32 to vector<16x1xf32>
    %213 = arith.divf %211, %212 : vector<16x1xf32>
    %214 = vector.broadcast %206 : vector<16x1xf32> to vector<16x32xf32>
    %215 = arith.subf %202, %214 : vector<16x32xf32>
    %cst_61 = arith.constant 9.99999974E-6 : f32
    %216 = vector.broadcast %cst_61 : f32 to vector<16x1xf32>
    %217 = arith.addf %213, %216 : vector<16x1xf32>
    %218 = math.rsqrt %217 : vector<16x1xf32>
    %219 = vector.broadcast %218 : vector<16x1xf32> to vector<16x32xf32>
    %220 = arith.mulf %215, %219 : vector<16x32xf32>
    %221 = vector.broadcast %131 : vector<1x32xf32> to vector<16x32xf32>
    %222 = arith.mulf %220, %221 : vector<16x32xf32>
    %223 = vector.broadcast %132 : vector<1x32xf32> to vector<16x32xf32>
    %224 = arith.addf %222, %223 : vector<16x32xf32>
    %225 = arith.addf %166, %224 : vector<16x32xf32>
    %c0_62 = arith.constant 0 : index
    %c0_63 = arith.constant 0 : index
    %226 = vector.load %arg4[%c0_62, %c0_63] : memref<16x32xf32, #tpu.memory_space<vmem>>, vector<16x32xf32>
    tpu.vector_store %arg4[%c0_62, %c0_63], %225 {strides = array<i32>} : memref<16x32xf32, #tpu.memory_space<vmem>>, vector<16x32xf32>,
    return
  }
}

</mosaic_0001>

<llo_original>
// kernel: tpu_custom_call.1
$region0: #{tpu_custom_call.1}
  #allocation0 [shape = 'u32[]', space=smem, size = 0x4, offset = 0x4, fixed_abs, tag = 'smem constant byte address 0x4 - core index']
  #allocation1 [shape = 'u32[144,128]{1,0:T(1,128)}', space=vmem, size = 0x12000, scoped, tag = 'internal scratch']
  %s0 = inlined_call_operand.vmem [shape: s32[16,1], index: 0, kind: input, shape index: {}]
  %s1 = inlined_call_operand.vmem [shape: f32[32,32], index: 1, kind: input, shape index: {}]
  %s2 = inlined_call_operand.hbm [shape: f32[2,128,128], index: 2, kind: input, shape index: {}]
  %s3 = inlined_call_operand.vmem [shape: f32[2,9,64], index: 3, kind: input, shape index: {}]
  %s4 = inlined_call_operand.hbm [shape: f32[16,32], index: 4, kind: output, shape index: {}]
  %s5 = sld [smem:[#allocation0]]
  $region30: #{tpu_custom_call.1} parent=0
    _
  %s7 = ssub.s32 1, %s5
  %s8 = scalar_select 0, %s7, %s5
  $region1: #{tpu_custom_call.1} parent=0
    #allocation2 [shape = 'u8[131072]{0}', space=vmem, size = 0x20000, scoped, tag = 'input window, operand 2, single buffered']
    #allocation3 [shape = 's32[1]{0}', space=sflag, size = 0x4, scoped, tag = 'scoped memory for tpu_custom_call.1']
    #allocation4 [shape = 's32[1]{0}', space=sflag, size = 0x4, scoped, tag = 'scoped memory for tpu_custom_call.1']
    #allocation5 [shape = 'u8[8192]{0}', space=vmem, size = 0x2000, scoped, tag = 'output window, operand 0, single buffered']
    %9 = vsyncpa [#allocation3], 0
    %10 = vsyncpa [#allocation4], 0
    // Predicated region
    $region2: #{tpu_custom_call.1} parent=1 // pred_check
      _
    $region3: #{tpu_custom_call.1} parent=1 // pred_check_branch
      %12 = sbr.rel (0) target = $region5
    $region4: #{tpu_custom_call.1} parent=1 // pred_region
      _
    $region5: #{tpu_custom_call.1} parent=1 // pred_fallthru
      _
    // Predicated region
    $region6: #{tpu_custom_call.1} parent=1 // pred_check
      _
    $region7: #{tpu_custom_call.1} parent=1 // pred_check_branch
      %14 = sbr.rel (0) target = $region9
    $region8: #{tpu_custom_call.1} parent=1 // pred_region
      _
    $region9: #{tpu_custom_call.1} parent=1 // pred_fallthru
      _
    // Predicated region
    $region10: #{tpu_custom_call.1} parent=1 // pred_check
      _
    $region11: #{tpu_custom_call.1} parent=1 // pred_check_branch
      %16 = sbr.rel (0) target = $region13
    $region12: #{tpu_custom_call.1} parent=1 // pred_region
      %s18 = ssub.s32 4096, 4096
      %19 = vsyncadd [#allocation3], %s18
      %s20 = sshll.u32 [#allocation2], 4
      %s21 = int_to_ptr.vmem [resolvable:$true] %s20
      %26 = dma.hbm_to_vmem [thread:$0]  %s2, 4096, %s21, [#allocation3], 128, 128, 8
    $region13: #{tpu_custom_call.1} parent=1 // pred_fallthru
      _
    // Predicated region
    $region14: #{tpu_custom_call.1} parent=1 // pred_check
      _
    $region15: #{tpu_custom_call.1} parent=1 // pred_check_branch
      %28 = sbr.rel (0) target = $region17
    $region16: #{tpu_custom_call.1} parent=1 // pred_region
      _
    $region17: #{tpu_custom_call.1} parent=1 // pred_fallthru
      _
    // Predicated region
    $region18: #{tpu_custom_call.1} parent=1 // pred_check
      _
    $region19: #{tpu_custom_call.1} parent=1 // pred_check_branch
      %30 = sbr.rel (0) target = $region21
    $region20: #{tpu_custom_call.1} parent=1 // pred_region
      %31 = dma.done [#allocation3], 4096
    $region21: #{tpu_custom_call.1} parent=1 // pred_fallthru
      _
    %v32 = vld [vmem:[%s0] sm:$0xff]
    %v33 = vld [vmem:[%s0 + $0x8] sm:$0xff]
    %v34 = vlaneseq
    %v35 = vand.u32 %v34, 127
    %36 = vset.pattern.permute.xlu0 0
    %37 = vperm.xlu0 %36, %v32
    %v38 = vpop.permute.xlu0 %37
    %39 = vset.pattern.permute.xlu0 0
    %40 = vperm.xlu0 %39, %v33
    %v41 = vpop.permute.xlu0 %40
    %vm42 = vcmp.eq.s32.totalorder %v35, %v38
    %vm43 = vcmp.eq.s32.totalorder %v35, %v41
    %v44 = vsel %vm42, 1, 0
    %v45 = vsel %vm43, 1, 0
    %v46 = vcvt.s32.f32 %v44
    %v47 = vcvt.s32.f32 %v45
    %v48 = vld [vmem:[%s1] sm:$0xff]
    %v49 = vld [vmem:[%s1 + $0x8] sm:$0xff]
    %v50 = vld [vmem:[%s1 + $0x10] sm:$0xff]
    %v51 = vld [vmem:[%s1 + $0x18] sm:$0xff]
    %vm52 = vcmask 261120
    %v54 = vsel %vm52, %v46, 0
    %v57 = vsel %vm52, %v47, 0
    %59 = vmatprep.subr.mxu0 0.0
    %60 = vmatpush1.msra.mxu0 0.0
    %61 = vmatprep.subr.mxu0 0.0
    %62 = vmatpush1.msra.mxu0 0.0
    %63 = vmatprep.subr.mxu0 0.0
    %64 = vmatpush1.msra.mxu0 0.0
    %65 = vmatprep.subr.mxu0 0.0
    %66 = vmatpush1.msra.mxu0 0.0
    %67 = vmatprep.subr.mxu0 0.0
    %68 = vmatpush1.msra.mxu0 0.0
    %69 = vmatprep.subr.mxu0 0.0
    %70 = vmatpush1.msra.mxu0 0.0
    %71 = vmatprep.subr.mxu0 0.0
    %72 = vmatpush1.msra.mxu0 0.0
    %73 = vmatprep.subr.mxu0 0.0
    %74 = vmatpush1.msra.mxu0 0.0
    %75 = vmatprep.subr.mxu0 0.0
    %76 = vmatpush1.msra.mxu0 0.0
    %77 = vmatprep.subr.mxu0 0.0
    %78 = vmatpush1.msra.mxu0 0.0
    %79 = vmatprep.subr.mxu0 0.0
    %80 = vmatpush1.msra.mxu0 0.0
    %81 = vmatprep.subr.mxu0 0.0
    %82 = vmatpush1.msra.mxu0 0.0
    %83 = vmatprep.subr.mxu0 0.0
    %84 = vmatpush1.msra.mxu0 %v51
    %85 = vmatprep.subr.mxu0 0.0
    %86 = vmatpush1.msra.mxu0 %v50
    %87 = vmatprep.subr.mxu0 0.0
    %88 = vmatpush1.msra.mxu0 %v49
    %89 = vmatprep.subr.mxu0 0.0
    %90 = vmatpush1.msra.mxu0 %v48
    %91 = vmatprep.subr.mxu0 0.0
    %92 = vmatpush2.msra.mxu0 0.0
    %93 = vmatprep.subr.mxu0 0.0
    %94 = vmatpush2.msra.mxu0 0.0
    %95 = vmatprep.subr.mxu0 0.0
    %96 = vmatpush2.msra.mxu0 0.0
    %97 = vmatprep.subr.mxu0 0.0
    %98 = vmatpush2.msra.mxu0 0.0
    %99 = vmatprep.subr.mxu0 0.0
    %100 = vmatpush2.msra.mxu0 0.0
    %101 = vmatprep.subr.mxu0 0.0
    %102 = vmatpush2.msra.mxu0 0.0
    %103 = vmatprep.subr.mxu0 0.0
    %104 = vmatpush2.msra.mxu0 0.0
    %105 = vmatprep.subr.mxu0 0.0
    %106 = vmatpush2.msra.mxu0 0.0
    %107 = vmatprep.subr.mxu0 0.0
    %108 = vmatpush2.msra.mxu0 0.0
    %109 = vmatprep.subr.mxu0 0.0
    %110 = vmatpush2.msra.mxu0 0.0
    %111 = vmatprep.subr.mxu0 0.0
    %112 = vmatpush2.msra.mxu0 0.0
    %113 = vmatprep.subr.mxu0 0.0
    %114 = vmatpush2.msra.mxu0 0.0
    %115 = vmatprep.subr.mxu0 0.0
    %116 = vmatpush2.msra.mxu0 0.0
    %117 = vmatprep.subr.mxu0 0.0
    %118 = vmatpush2.msra.mxu0 0.0
    %119 = vmatprep.subr.mxu0 0.0
    %120 = vmatpush2.msra.mxu0 0.0
    %121 = vmatprep.subr.mxu0 0.0
    %122 = vmatpush2.msra.mxu0 0.0
    %123 = vmatprep.mubr.f32.mxu0 0.0
    %124 = vmatmul.mubr.f32.gmra.mxu0 %v54
    %v125 = vpop.f32.mrf.mxu0
    %v126 = vadd.f32 0.0, %v125
    %v127 = vpop.f32.mrf.mxu0
    %128 = vmatprep.mubr.f32.mxu0 0.0
    %129 = vmatmul.mubr.f32.gmra.mxu0 %v57
    %v130 = vpop.f32.mrf.mxu0
    %v131 = vadd.f32 0.0, %v130
    %v132 = vpop.f32.mrf.mxu0
    %133 = vdwg.mxu0
    %v134 = vld [vmem:[#allocation2] sm:$0xff]
    %v135 = vld [vmem:[#allocation2 + $0x8] sm:$0xff]
    %v136 = vld [vmem:[#allocation2 + $0x10] sm:$0xff]
    %v137 = vld [vmem:[#allocation2 + $0x18] sm:$0xff]
    %v138 = vld [vmem:[#allocation2 + $0x20] sm:$0xff]
    %v139 = vld [vmem:[#allocation2 + $0x28] sm:$0xff]
    %v140 = vld [vmem:[#allocation2 + $0x30] sm:$0xff]
    %v141 = vld [vmem:[#allocation2 + $0x38] sm:$0xff]
    %v142 = vld [vmem:[#allocation2 + $0x40] sm:$0xff]
    %v143 = vld [vmem:[#allocation2 + $0x48] sm:$0xff]
    %v144 = vld [vmem:[#allocation2 + $0x50] sm:$0xff]
    %v145 = vld [vmem:[#allocation2 + $0x58] sm:$0xff]
    %v146 = vld [vmem:[#allocation2 + $0x60] sm:$0xff]
    %v147 = vld [vmem:[#allocation2 + $0x68] sm:$0xff]
    %v148 = vld [vmem:[#allocation2 + $0x70] sm:$0xff]
    %v149 = vld [vmem:[#allocation2 + $0x78] sm:$0xff]
    %v150 = vld [vmem:[%s3] sm:$0xff]
    %v151 = vld [vmem:[%s3 + $0x8] sm:$0x1]
    %v152 = vlaneseq
    %v153 = vshrl.u32 %v152, 7
    %v154 = vsub.s32 0, %v153
    %v155 = vrot.slane %v150, %v154
    %v157 = vsel %vm52, %v126, 0
    %v160 = vsel %vm52, %v131, 0
    %162 = vmatprep.subr.mxu0 0.0
    %163 = vmatpush1.msra.mxu0 0.0
    %164 = vmatprep.subr.mxu0 0.0
    %165 = vmatpush1.msra.mxu0 0.0
    %166 = vmatprep.subr.mxu0 0.0
    %167 = vmatpush1.msra.mxu0 0.0
    %168 = vmatprep.subr.mxu0 0.0
    %169 = vmatpush1.msra.mxu0 0.0
    %170 = vmatprep.subr.mxu0 0.0
    %171 = vmatpush1.msra.mxu0 0.0
    %172 = vmatprep.subr.mxu0 0.0
    %173 = vmatpush1.msra.mxu0 0.0
    %174 = vmatprep.subr.mxu0 0.0
    %175 = vmatpush1.msra.mxu0 0.0
    %176 = vmatprep.subr.mxu0 0.0
    %177 = vmatpush1.msra.mxu0 0.0
    %178 = vmatprep.subr.mxu0 0.0
    %179 = vmatpush1.msra.mxu0 0.0
    %180 = vmatprep.subr.mxu0 0.0
    %181 = vmatpush1.msra.mxu0 0.0
    %182 = vmatprep.subr.mxu0 0.0
    %183 = vmatpush1.msra.mxu0 0.0
    %184 = vmatprep.subr.mxu0 0.0
    %185 = vmatpush1.msra.mxu0 0.0
    %186 = vmatprep.subr.mxu0 0.0
    %187 = vmatpush1.msra.mxu0 %v137
    %188 = vmatprep.subr.mxu0 0.0
    %189 = vmatpush1.msra.mxu0 %v136
    %190 = vmatprep.subr.mxu0 0.0
    %191 = vmatpush1.msra.mxu0 %v135
    %192 = vmatprep.subr.mxu0 0.0
    %193 = vmatpush1.msra.mxu0 %v134
    %194 = vmatprep.subr.mxu0 0.0
    %195 = vmatpush2.msra.mxu0 0.0
    %196 = vmatprep.subr.mxu0 0.0
    %197 = vmatpush2.msra.mxu0 0.0
    %198 = vmatprep.subr.mxu0 0.0
    %199 = vmatpush2.msra.mxu0 0.0
    %200 = vmatprep.subr.mxu0 0.0
    %201 = vmatpush2.msra.mxu0 0.0
    %202 = vmatprep.subr.mxu0 0.0
    %203 = vmatpush2.msra.mxu0 0.0
    %204 = vmatprep.subr.mxu0 0.0
    %205 = vmatpush2.msra.mxu0 0.0
    %206 = vmatprep.subr.mxu0 0.0
    %207 = vmatpush2.msra.mxu0 0.0
    %208 = vmatprep.subr.mxu0 0.0
    %209 = vmatpush2.msra.mxu0 0.0
    %210 = vmatprep.subr.mxu0 0.0
    %211 = vmatpush2.msra.mxu0 0.0
    %212 = vmatprep.subr.mxu0 0.0
    %213 = vmatpush2.msra.mxu0 0.0
    %214 = vmatprep.subr.mxu0 0.0
    %215 = vmatpush2.msra.mxu0 0.0
    %216 = vmatprep.subr.mxu0 0.0
    %217 = vmatpush2.msra.mxu0 0.0
    %218 = vmatprep.subr.mxu0 0.0
    %219 = vmatpush2.msra.mxu0 0.0
    %220 = vmatprep.subr.mxu0 0.0
    %221 = vmatpush2.msra.mxu0 0.0
    %222 = vmatprep.subr.mxu0 0.0
    %223 = vmatpush2.msra.mxu0 0.0
    %224 = vmatprep.subr.mxu0 0.0
    %225 = vmatpush2.msra.mxu0 0.0
    %226 = vmatprep.mubr.f32.mxu0 0.0
    %227 = vmatmul.mubr.f32.gmra.mxu0 %v157
    %v228 = vpop.f32.mrf.mxu0
    %v229 = vadd.f32 %v155, %v228
    %v230 = vpop.f32.mrf.mxu0
    %231 = vmatprep.mubr.f32.mxu0 0.0
    %232 = vmatmul.mubr.f32.gmra.mxu0 %v160
    %v233 = vpop.f32.mrf.mxu0
    %v234 = vadd.f32 %v155, %v233
    %v235 = vpop.f32.mrf.mxu0
    %236 = vdwg.mxu0
    %v237 = vmul.f32 %v229, 0.5
    %v238 = vmul.f32 %v234, 0.5
    %v239 = vmul.f32 %v229, 0.70710677
    %v240 = vmul.f32 %v234, 0.70710677
    %v241 = verf.f32.pop %v239
    %v242 = verf.f32.pop %v240
    %v243 = vadd.f32 %v241, 1.0
    %v244 = vadd.f32 %v242, 1.0
    %v245 = vmul.f32 %v237, %v243
    %v246 = vmul.f32 %v238, %v244
    %v247 = vsel %vm52, %v245, 0.0
    %248 = vadd.xlane.f32.xlu0 %v247
    %v249 = vpop.xlane.xlu0 %248
    %v250 = vsel %vm52, %v246, 0.0
    %251 = vadd.xlane.f32.xlu0 %v250
    %v252 = vpop.xlane.xlu0 %251
    %v253 = vrcp.pop 32.0
    %v254 = vmul.f32 %v249, %v253
    %v255 = vmul.f32 %v252, %v253
    %v256 = vsub.f32 %v245, %v254
    %v257 = vsub.f32 %v246, %v255
    %v258 = vmul.f32 %v256, %v256
    %v259 = vmul.f32 %v257, %v257
    %v260 = vsel %vm52, %v258, 0.0
    %261 = vadd.xlane.f32.xlu0 %v260
    %v262 = vpop.xlane.xlu0 %261
    %v263 = vsel %vm52, %v259, 0.0
    %264 = vadd.xlane.f32.xlu0 %v263
    %v265 = vpop.xlane.xlu0 %264
    %v266 = vmul.f32 %v262, %v253
    %v267 = vmul.f32 %v265, %v253
    %v268 = vadd.f32 %v266, 1e-05
    %v269 = vadd.f32 %v267, 1e-05
    %v270 = vrsqrt.pop %v268
    %v271 = vrsqrt.pop %v269
    %v272 = vmul.f32 %v256, %v270
    %v273 = vmul.f32 %v257, %v271
    %v274 = vlaneseq
    %v275 = vshrl.u32 %v274, 7
    %v276 = vsub.s32 3, %v275
    %v277 = vrot.slane %v150, %v276
    %v278 = vmul.f32 %v272, %v277
    %v279 = vmul.f32 %v273, %v277
    %v280 = vlaneseq
    %v281 = vshrl.u32 %v280, 7
    %v282 = vsub.s32 4, %v281
    %v283 = vrot.slane %v150, %v282
    %v284 = vadd.f32 %v278, %v283
    %v285 = vadd.f32 %v279, %v283
    %v286 = vadd.f32 %v126, %v284
    %v287 = vadd.f32 %v131, %v285
    %v288 = vlaneseq
    %v289 = vshrl.u32 %v288, 7
    %v290 = vsub.s32 1, %v289
    %v291 = vrot.slane %v150, %v290
    %v293 = vsel %vm52, %v286, 0
    %v296 = vsel %vm52, %v287, 0
    %298 = vmatprep.subr.mxu0 0.0
    %299 = vmatpush1.msra.mxu0 0.0
    %300 = vmatprep.subr.mxu0 0.0
    %301 = vmatpush1.msra.mxu0 0.0
    %302 = vmatprep.subr.mxu0 0.0
    %303 = vmatpush1.msra.mxu0 0.0
    %304 = vmatprep.subr.mxu0 0.0
    %305 = vmatpush1.msra.mxu0 0.0
    %306 = vmatprep.subr.mxu0 0.0
    %307 = vmatpush1.msra.mxu0 0.0
    %308 = vmatprep.subr.mxu0 0.0
    %309 = vmatpush1.msra.mxu0 0.0
    %310 = vmatprep.subr.mxu0 0.0
    %311 = vmatpush1.msra.mxu0 0.0
    %312 = vmatprep.subr.mxu0 0.0
    %313 = vmatpush1.msra.mxu0 0.0
    %314 = vmatprep.subr.mxu0 0.0
    %315 = vmatpush1.msra.mxu0 0.0
    %316 = vmatprep.subr.mxu0 0.0
    %317 = vmatpush1.msra.mxu0 0.0
    %318 = vmatprep.subr.mxu0 0.0
    %319 = vmatpush1.msra.mxu0 0.0
    %320 = vmatprep.subr.mxu0 0.0
    %321 = vmatpush1.msra.mxu0 0.0
    %322 = vmatprep.subr.mxu0 0.0
    %323 = vmatpush1.msra.mxu0 %v141
    %324 = vmatprep.subr.mxu0 0.0
    %325 = vmatpush1.msra.mxu0 %v140
    %326 = vmatprep.subr.mxu0 0.0
    %327 = vmatpush1.msra.mxu0 %v139
    %328 = vmatprep.subr.mxu0 0.0
    %329 = vmatpush1.msra.mxu0 %v138
    %330 = vmatprep.subr.mxu0 0.0
    %331 = vmatpush2.msra.mxu0 0.0
    %332 = vmatprep.subr.mxu0 0.0
    %333 = vmatpush2.msra.mxu0 0.0
    %334 = vmatprep.subr.mxu0 0.0
    %335 = vmatpush2.msra.mxu0 0.0
    %336 = vmatprep.subr.mxu0 0.0
    %337 = vmatpush2.msra.mxu0 0.0
    %338 = vmatprep.subr.mxu0 0.0
    %339 = vmatpush2.msra.mxu0 0.0
    %340 = vmatprep.subr.mxu0 0.0
    %341 = vmatpush2.msra.mxu0 0.0
    %342 = vmatprep.subr.mxu0 0.0
    %343 = vmatpush2.msra.mxu0 0.0
    %344 = vmatprep.subr.mxu0 0.0
    %345 = vmatpush2.msra.mxu0 0.0
    %346 = vmatprep.subr.mxu0 0.0
    %347 = vmatpush2.msra.mxu0 0.0
    %348 = vmatprep.subr.mxu0 0.0
    %349 = vmatpush2.msra.mxu0 0.0
    %350 = vmatprep.subr.mxu0 0.0
    %351 = vmatpush2.msra.mxu0 0.0
    %352 = vmatprep.subr.mxu0 0.0
    %353 = vmatpush2.msra.mxu0 0.0
    %354 = vmatprep.subr.mxu0 0.0
    %355 = vmatpush2.msra.mxu0 0.0
    %356 = vmatprep.subr.mxu0 0.0
    %357 = vmatpush2.msra.mxu0 0.0
    %358 = vmatprep.subr.mxu0 0.0
    %359 = vmatpush2.msra.mxu0 0.0
    %360 = vmatprep.subr.mxu0 0.0
    %361 = vmatpush2.msra.mxu0 0.0
    %362 = vmatprep.mubr.f32.mxu0 0.0
    %363 = vmatmul.mubr.f32.gmra.mxu0 %v293
    %v364 = vpop.f32.mrf.mxu0
    %v365 = vadd.f32 %v291, %v364
    %v366 = vpop.f32.mrf.mxu0
    %367 = vmatprep.mubr.f32.mxu0 0.0
    %368 = vmatmul.mubr.f32.gmra.mxu0 %v296
    %v369 = vpop.f32.mrf.mxu0
    %v370 = vadd.f32 %v291, %v369
    %v371 = vpop.f32.mrf.mxu0
    %372 = vdwg.mxu0
    %v373 = vmul.f32 %v365, 0.5
    %v374 = vmul.f32 %v370, 0.5
    %v375 = vmul.f32 %v365, 0.70710677
    %v376 = vmul.f32 %v370, 0.70710677
    %v377 = verf.f32.pop %v375
    %v378 = verf.f32.pop %v376
    %v379 = vadd.f32 %v377, 1.0
    %v380 = vadd.f32 %v378, 1.0
    %v381 = vmul.f32 %v373, %v379
    %v382 = vmul.f32 %v374, %v380
    %v383 = vlaneseq
    %v384 = vshrl.u32 %v383, 7
    %v385 = vsub.s32 2, %v384
    %v386 = vrot.slane %v150, %v385
    %vm387 = vcmask 523264
    %v389 = vsel %vm387, %v381, 0
    %v392 = vsel %vm387, %v382, 0
    %394 = vmatprep.subr.mxu0 0.0
    %395 = vmatpush1.msra.mxu0 0.0
    %396 = vmatprep.subr.mxu0 0.0
    %397 = vmatpush1.msra.mxu0 0.0
    %398 = vmatprep.subr.mxu0 0.0
    %399 = vmatpush1.msra.mxu0 0.0
    %400 = vmatprep.subr.mxu0 0.0
    %401 = vmatpush1.msra.mxu0 0.0
    %402 = vmatprep.subr.mxu0 0.0
    %403 = vmatpush1.msra.mxu0 0.0
    %404 = vmatprep.subr.mxu0 0.0
    %405 = vmatpush1.msra.mxu0 0.0
    %406 = vmatprep.subr.mxu0 0.0
    %407 = vmatpush1.msra.mxu0 0.0
    %408 = vmatprep.subr.mxu0 0.0
    %409 = vmatpush1.msra.mxu0 0.0
    %410 = vmatprep.subr.mxu0 0.0
    %411 = vmatpush1.msra.mxu0 %v149
    %412 = vmatprep.subr.mxu0 0.0
    %413 = vmatpush1.msra.mxu0 %v148
    %414 = vmatprep.subr.mxu0 0.0
    %415 = vmatpush1.msra.mxu0 %v147
    %416 = vmatprep.subr.mxu0 0.0
    %417 = vmatpush1.msra.mxu0 %v146
    %418 = vmatprep.subr.mxu0 0.0
    %419 = vmatpush1.msra.mxu0 %v145
    %420 = vmatprep.subr.mxu0 0.0
    %421 = vmatpush1.msra.mxu0 %v144
    %422 = vmatprep.subr.mxu0 0.0
    %423 = vmatpush1.msra.mxu0 %v143
    %424 = vmatprep.subr.mxu0 0.0
    %425 = vmatpush1.msra.mxu0 %v142
    %426 = vmatprep.subr.mxu0 0.0
    %427 = vmatpush2.msra.mxu0 0.0
    %428 = vmatprep.subr.mxu0 0.0
    %429 = vmatpush2.msra.mxu0 0.0
    %430 = vmatprep.subr.mxu0 0.0
    %431 = vmatpush2.msra.mxu0 0.0
    %432 = vmatprep.subr.mxu0 0.0
    %433 = vmatpush2.msra.mxu0 0.0
    %434 = vmatprep.subr.mxu0 0.0
    %435 = vmatpush2.msra.mxu0 0.0
    %436 = vmatprep.subr.mxu0 0.0
    %437 = vmatpush2.msra.mxu0 0.0
    %438 = vmatprep.subr.mxu0 0.0
    %439 = vmatpush2.msra.mxu0 0.0
    %440 = vmatprep.subr.mxu0 0.0
    %441 = vmatpush2.msra.mxu0 0.0
    %442 = vmatprep.subr.mxu0 0.0
    %443 = vmatpush2.msra.mxu0 0.0
    %444 = vmatprep.subr.mxu0 0.0
    %445 = vmatpush2.msra.mxu0 0.0
    %446 = vmatprep.subr.mxu0 0.0
    %447 = vmatpush2.msra.mxu0 0.0
    %448 = vmatprep.subr.mxu0 0.0
    %449 = vmatpush2.msra.mxu0 0.0
    %450 = vmatprep.subr.mxu0 0.0
    %451 = vmatpush2.msra.mxu0 0.0
    %452 = vmatprep.subr.mxu0 0.0
    %453 = vmatpush2.msra.mxu0 0.0
    %454 = vmatprep.subr.mxu0 0.0
    %455 = vmatpush2.msra.mxu0 0.0
    %456 = vmatprep.subr.mxu0 0.0
    %457 = vmatpush2.msra.mxu0 0.0
    %458 = vmatprep.mubr.f32.mxu0 0.0
    %459 = vmatmul.mubr.f32.gmra.mxu0 %v389
    %v460 = vpop.f32.mrf.mxu0
    %v461 = vadd.f32 %v386, %v460
    %v462 = vpop.f32.mrf.mxu0
    %463 = vmatprep.mubr.f32.mxu0 0.0
    %464 = vmatmul.mubr.f32.gmra.mxu0 %v392
    %v465 = vpop.f32.mrf.mxu0
    %v466 = vadd.f32 %v386, %v465
    %v467 = vpop.f32.mrf.mxu0
    %468 = vdwg.mxu0
    %v469 = vsel %vm52, %v461, 0.0
    %470 = vadd.xlane.f32.xlu0 %v469
    %v471 = vpop.xlane.xlu0 %470
    %v472 = vsel %vm52, %v466, 0.0
    %473 = vadd.xlane.f32.xlu0 %v472
    %v474 = vpop.xlane.xlu0 %473
    %v475 = vmul.f32 %v471, %v253
    %v476 = vmul.f32 %v474, %v253
    %v477 = vsub.f32 %v461, %v475
    %v478 = vsub.f32 %v466, %v476
    %v479 = vmul.f32 %v477, %v477
    %v480 = vmul.f32 %v478, %v478
    %v481 = vsel %vm52, %v479, 0.0
    %482 = vadd.xlane.f32.xlu0 %v481
    %v483 = vpop.xlane.xlu0 %482
    %v484 = vsel %vm52, %v480, 0.0
    %485 = vadd.xlane.f32.xlu0 %v484
    %v486 = vpop.xlane.xlu0 %485
    %v487 = vmul.f32 %v483, %v253
    %v488 = vmul.f32 %v486, %v253
    %v489 = vadd.f32 %v487, 1e-05
    %v490 = vadd.f32 %v488, 1e-05
    %v491 = vrsqrt.pop %v489
    %v492 = vrsqrt.pop %v490
    %v493 = vmul.f32 %v477, %v491
    %v494 = vmul.f32 %v478, %v492
    %v495 = vlaneseq
    %v496 = vshrl.u32 %v495, 7
    %v497 = vsub.s32 5, %v496
    %v498 = vrot.slane %v150, %v497
    %v499 = vmul.f32 %v493, %v498
    %v500 = vmul.f32 %v494, %v498
    %v501 = vlaneseq
    %v502 = vshrl.u32 %v501, 7
    %v503 = vsub.s32 6, %v502
    %v504 = vrot.slane %v150, %v503
    %v505 = vadd.f32 %v499, %v504
    %v506 = vadd.f32 %v500, %v504
    %v507 = vsel %vm52, %v505, 0.0
    %508 = vadd.xlane.f32.xlu0 %v507
    %v509 = vpop.xlane.xlu0 %508
    %v510 = vsel %vm52, %v506, 0.0
    %511 = vadd.xlane.f32.xlu0 %v510
    %v512 = vpop.xlane.xlu0 %511
    %v513 = vmul.f32 %v509, %v253
    %v514 = vmul.f32 %v512, %v253
    %v515 = vsub.f32 %v505, %v513
    %v516 = vsub.f32 %v506, %v514
    %v517 = vmul.f32 %v515, %v515
    %v518 = vmul.f32 %v516, %v516
    %v519 = vsel %vm52, %v517, 0.0
    %520 = vadd.xlane.f32.xlu0 %v519
    %v521 = vpop.xlane.xlu0 %520
    %v522 = vsel %vm52, %v518, 0.0
    %523 = vadd.xlane.f32.xlu0 %v522
    %v524 = vpop.xlane.xlu0 %523
    %v525 = vmul.f32 %v521, %v253
    %v526 = vmul.f32 %v524, %v253
    %v527 = vadd.f32 %v525, 1e-05
    %v528 = vadd.f32 %v526, 1e-05
    %v529 = vrsqrt.pop %v527
    %v530 = vrsqrt.pop %v528
    %v531 = vmul.f32 %v515, %v529
    %v532 = vmul.f32 %v516, %v530
    %v533 = vlaneseq
    %v534 = vshrl.u32 %v533, 7
    %v535 = vsub.s32 7, %v534
    %v536 = vrot.slane %v150, %v535
    %v537 = vmul.f32 %v531, %v536
    %v538 = vmul.f32 %v532, %v536
    %v539 = vlaneseq
    %v540 = vshrl.u32 %v539, 7
    %v541 = vsub.s32 0, %v540
    %v542 = vrot.slane %v151, %v541
    %v543 = vadd.f32 %v537, %v542
    %v544 = vadd.f32 %v538, %v542
    %v545 = vadd.f32 %v286, %v543
    %v546 = vadd.f32 %v287, %v544
    %s547 = scalar_lea.vmem [#allocation2], 128
    %v548 = vld [vmem:[%s547] sm:$0xff]
    %v549 = vld [vmem:[%s547 + $0x8] sm:$0xff]
    %v550 = vld [vmem:[%s547 + $0x10] sm:$0xff]
    %v551 = vld [vmem:[%s547 + $0x18] sm:$0xff]
    %v552 = vld [vmem:[%s547 + $0x20] sm:$0xff]
    %v553 = vld [vmem:[%s547 + $0x28] sm:$0xff]
    %v554 = vld [vmem:[%s547 + $0x30] sm:$0xff]
    %v555 = vld [vmem:[%s547 + $0x38] sm:$0xff]
    %v556 = vld [vmem:[%s547 + $0x40] sm:$0xff]
    %v557 = vld [vmem:[%s547 + $0x48] sm:$0xff]
    %v558 = vld [vmem:[%s547 + $0x50] sm:$0xff]
    %v559 = vld [vmem:[%s547 + $0x58] sm:$0xff]
    %v560 = vld [vmem:[%s547 + $0x60] sm:$0xff]
    %v561 = vld [vmem:[%s547 + $0x68] sm:$0xff]
    %v562 = vld [vmem:[%s547 + $0x70] sm:$0xff]
    %v563 = vld [vmem:[%s547 + $0x78] sm:$0xff]
    %s564 = scalar_lea.vmem %s3, 16
    %v565 = vld [vmem:[%s564] sm:$0xff]
    %v566 = vld [vmem:[%s564 + $0x8] sm:$0x1]
    %v567 = vlaneseq
    %v568 = vshrl.u32 %v567, 7
    %v569 = vsub.s32 0, %v568
    %v570 = vrot.slane %v565, %v569
    %v572 = vsel %vm52, %v545, 0
    %v575 = vsel %vm52, %v546, 0
    %577 = vmatprep.subr.mxu0 0.0
    %578 = vmatpush1.msra.mxu0 0.0
    %579 = vmatprep.subr.mxu0 0.0
    %580 = vmatpush1.msra.mxu0 0.0
    %581 = vmatprep.subr.mxu0 0.0
    %582 = vmatpush1.msra.mxu0 0.0
    %583 = vmatprep.subr.mxu0 0.0
    %584 = vmatpush1.msra.mxu0 0.0
    %585 = vmatprep.subr.mxu0 0.0
    %586 = vmatpush1.msra.mxu0 0.0
    %587 = vmatprep.subr.mxu0 0.0
    %588 = vmatpush1.msra.mxu0 0.0
    %589 = vmatprep.subr.mxu0 0.0
    %590 = vmatpush1.msra.mxu0 0.0
    %591 = vmatprep.subr.mxu0 0.0
    %592 = vmatpush1.msra.mxu0 0.0
    %593 = vmatprep.subr.mxu0 0.0
    %594 = vmatpush1.msra.mxu0 0.0
    %595 = vmatprep.subr.mxu0 0.0
    %596 = vmatpush1.msra.mxu0 0.0
    %597 = vmatprep.subr.mxu0 0.0
    %598 = vmatpush1.msra.mxu0 0.0
    %599 = vmatprep.subr.mxu0 0.0
    %600 = vmatpush1.msra.mxu0 0.0
    %601 = vmatprep.subr.mxu0 0.0
    %602 = vmatpush1.msra.mxu0 %v551
    %603 = vmatprep.subr.mxu0 0.0
    %604 = vmatpush1.msra.mxu0 %v550
    %605 = vmatprep.subr.mxu0 0.0
    %606 = vmatpush1.msra.mxu0 %v549
    %607 = vmatprep.subr.mxu0 0.0
    %608 = vmatpush1.msra.mxu0 %v548
    %609 = vmatprep.subr.mxu0 0.0
    %610 = vmatpush2.msra.mxu0 0.0
    %611 = vmatprep.subr.mxu0 0.0
    %612 = vmatpush2.msra.mxu0 0.0
    %613 = vmatprep.subr.mxu0 0.0
    %614 = vmatpush2.msra.mxu0 0.0
    %615 = vmatprep.subr.mxu0 0.0
    %616 = vmatpush2.msra.mxu0 0.0
    %617 = vmatprep.subr.mxu0 0.0
    %618 = vmatpush2.msra.mxu0 0.0
    %619 = vmatprep.subr.mxu0 0.0
    %620 = vmatpush2.msra.mxu0 0.0
    %621 = vmatprep.subr.mxu0 0.0
    %622 = vmatpush2.msra.mxu0 0.0
    %623 = vmatprep.subr.mxu0 0.0
    %624 = vmatpush2.msra.mxu0 0.0
    %625 = vmatprep.subr.mxu0 0.0
    %626 = vmatpush2.msra.mxu0 0.0
    %627 = vmatprep.subr.mxu0 0.0
    %628 = vmatpush2.msra.mxu0 0.0
    %629 = vmatprep.subr.mxu0 0.0
    %630 = vmatpush2.msra.mxu0 0.0
    %631 = vmatprep.subr.mxu0 0.0
    %632 = vmatpush2.msra.mxu0 0.0
    %633 = vmatprep.subr.mxu0 0.0
    %634 = vmatpush2.msra.mxu0 0.0
    %635 = vmatprep.subr.mxu0 0.0
    %636 = vmatpush2.msra.mxu0 0.0
    %637 = vmatprep.subr.mxu0 0.0
    %638 = vmatpush2.msra.mxu0 0.0
    %639 = vmatprep.subr.mxu0 0.0
    %640 = vmatpush2.msra.mxu0 0.0
    %641 = vmatprep.mubr.f32.mxu0 0.0
    %642 = vmatmul.mubr.f32.gmra.mxu0 %v572
    %v643 = vpop.f32.mrf.mxu0
    %v644 = vadd.f32 %v570, %v643
    %v645 = vpop.f32.mrf.mxu0
    %646 = vmatprep.mubr.f32.mxu0 0.0
    %647 = vmatmul.mubr.f32.gmra.mxu0 %v575
    %v648 = vpop.f32.mrf.mxu0
    %v649 = vadd.f32 %v570, %v648
    %v650 = vpop.f32.mrf.mxu0
    %651 = vdwg.mxu0
    %v652 = vmul.f32 %v644, 0.5
    %v653 = vmul.f32 %v649, 0.5
    %v654 = vmul.f32 %v644, 0.70710677
    %v655 = vmul.f32 %v649, 0.70710677
    %v656 = verf.f32.pop %v654
    %v657 = verf.f32.pop %v655
    %v658 = vadd.f32 %v656, 1.0
    %v659 = vadd.f32 %v657, 1.0
    %v660 = vmul.f32 %v652, %v658
    %v661 = vmul.f32 %v653, %v659
    %v662 = vsel %vm52, %v660, 0.0
    %663 = vadd.xlane.f32.xlu0 %v662
    %v664 = vpop.xlane.xlu0 %663
    %v665 = vsel %vm52, %v661, 0.0
    %666 = vadd.xlane.f32.xlu0 %v665
    %v667 = vpop.xlane.xlu0 %666
    %v668 = vmul.f32 %v664, %v253
    %v669 = vmul.f32 %v667, %v253
    %v670 = vsub.f32 %v660, %v668
    %v671 = vsub.f32 %v661, %v669
    %v672 = vmul.f32 %v670, %v670
    %v673 = vmul.f32 %v671, %v671
    %v674 = vsel %vm52, %v672, 0.0
    %675 = vadd.xlane.f32.xlu0 %v674
    %v676 = vpop.xlane.xlu0 %675
    %v677 = vsel %vm52, %v673, 0.0
    %678 = vadd.xlane.f32.xlu0 %v677
    %v679 = vpop.xlane.xlu0 %678
    %v680 = vmul.f32 %v676, %v253
    %v681 = vmul.f32 %v679, %v253
    %v682 = vadd.f32 %v680, 1e-05
    %v683 = vadd.f32 %v681, 1e-05
    %v684 = vrsqrt.pop %v682
    %v685 = vrsqrt.pop %v683
    %v686 = vmul.f32 %v670, %v684
    %v687 = vmul.f32 %v671, %v685
    %v688 = vlaneseq
    %v689 = vshrl.u32 %v688, 7
    %v690 = vsub.s32 3, %v689
    %v691 = vrot.slane %v565, %v690
    %v692 = vmul.f32 %v686, %v691
    %v693 = vmul.f32 %v687, %v691
    %v694 = vlaneseq
    %v695 = vshrl.u32 %v694, 7
    %v696 = vsub.s32 4, %v695
    %v697 = vrot.slane %v565, %v696
    %v698 = vadd.f32 %v692, %v697
    %v699 = vadd.f32 %v693, %v697
    %v700 = vadd.f32 %v545, %v698
    %v701 = vadd.f32 %v546, %v699
    %v702 = vlaneseq
    %v703 = vshrl.u32 %v702, 7
    %v704 = vsub.s32 1, %v703
    %v705 = vrot.slane %v565, %v704
    %v707 = vsel %vm52, %v700, 0
    %v710 = vsel %vm52, %v701, 0
    %712 = vmatprep.subr.mxu0 0.0
    %713 = vmatpush1.msra.mxu0 0.0
    %714 = vmatprep.subr.mxu0 0.0
    %715 = vmatpush1.msra.mxu0 0.0
    %716 = vmatprep.subr.mxu0 0.0
    %717 = vmatpush1.msra.mxu0 0.0
    %718 = vmatprep.subr.mxu0 0.0
    %719 = vmatpush1.msra.mxu0 0.0
    %720 = vmatprep.subr.mxu0 0.0
    %721 = vmatpush1.msra.mxu0 0.0
    %722 = vmatprep.subr.mxu0 0.0
    %723 = vmatpush1.msra.mxu0 0.0
    %724 = vmatprep.subr.mxu0 0.0
    %725 = vmatpush1.msra.mxu0 0.0
    %726 = vmatprep.subr.mxu0 0.0
    %727 = vmatpush1.msra.mxu0 0.0
    %728 = vmatprep.subr.mxu0 0.0
    %729 = vmatpush1.msra.mxu0 0.0
    %730 = vmatprep.subr.mxu0 0.0
    %731 = vmatpush1.msra.mxu0 0.0
    %732 = vmatprep.subr.mxu0 0.0
    %733 = vmatpush1.msra.mxu0 0.0
    %734 = vmatprep.subr.mxu0 0.0
    %735 = vmatpush1.msra.mxu0 0.0
    %736 = vmatprep.subr.mxu0 0.0
    %737 = vmatpush1.msra.mxu0 %v555
    %738 = vmatprep.subr.mxu0 0.0
    %739 = vmatpush1.msra.mxu0 %v554
    %740 = vmatprep.subr.mxu0 0.0
    %741 = vmatpush1.msra.mxu0 %v553
    %742 = vmatprep.subr.mxu0 0.0
    %743 = vmatpush1.msra.mxu0 %v552
    %744 = vmatprep.subr.mxu0 0.0
    %745 = vmatpush2.msra.mxu0 0.0
    %746 = vmatprep.subr.mxu0 0.0
    %747 = vmatpush2.msra.mxu0 0.0
    %748 = vmatprep.subr.mxu0 0.0
    %749 = vmatpush2.msra.mxu0 0.0
    %750 = vmatprep.subr.mxu0 0.0
    %751 = vmatpush2.msra.mxu0 0.0
    %752 = vmatprep.subr.mxu0 0.0
    %753 = vmatpush2.msra.mxu0 0.0
    %754 = vmatprep.subr.mxu0 0.0
    %755 = vmatpush2.msra.mxu0 0.0
    %756 = vmatprep.subr.mxu0 0.0
    %757 = vmatpush2.msra.mxu0 0.0
    %758 = vmatprep.subr.mxu0 0.0
    %759 = vmatpush2.msra.mxu0 0.0
    %760 = vmatprep.subr.mxu0 0.0
    %761 = vmatpush2.msra.mxu0 0.0
    %762 = vmatprep.subr.mxu0 0.0
    %763 = vmatpush2.msra.mxu0 0.0
    %764 = vmatprep.subr.mxu0 0.0
    %765 = vmatpush2.msra.mxu0 0.0
    %766 = vmatprep.subr.mxu0 0.0
    %767 = vmatpush2.msra.mxu0 0.0
    %768 = vmatprep.subr.mxu0 0.0
    %769 = vmatpush2.msra.mxu0 0.0
    %770 = vmatprep.subr.mxu0 0.0
    %771 = vmatpush2.msra.mxu0 0.0
    %772 = vmatprep.subr.mxu0 0.0
    %773 = vmatpush2.msra.mxu0 0.0
    %774 = vmatprep.subr.mxu0 0.0
    %775 = vmatpush2.msra.mxu0 0.0
    %776 = vmatprep.mubr.f32.mxu0 0.0
    %777 = vmatmul.mubr.f32.gmra.mxu0 %v707
    %v778 = vpop.f32.mrf.mxu0
    %v779 = vadd.f32 %v705, %v778
    %v780 = vpop.f32.mrf.mxu0
    %781 = vmatprep.mubr.f32.mxu0 0.0
    %782 = vmatmul.mubr.f32.gmra.mxu0 %v710
    %v783 = vpop.f32.mrf.mxu0
    %v784 = vadd.f32 %v705, %v783
    %v785 = vpop.f32.mrf.mxu0
    %786 = vdwg.mxu0
    %v787 = vmul.f32 %v779, 0.5
    %v788 = vmul.f32 %v784, 0.5
    %v789 = vmul.f32 %v779, 0.70710677
    %v790 = vmul.f32 %v784, 0.70710677
    %v791 = verf.f32.pop %v789
    %v792 = verf.f32.pop %v790
    %v793 = vadd.f32 %v791, 1.0
    %v794 = vadd.f32 %v792, 1.0
    %v795 = vmul.f32 %v787, %v793
    %v796 = vmul.f32 %v788, %v794
    %v797 = vlaneseq
    %v798 = vshrl.u32 %v797, 7
    %v799 = vsub.s32 2, %v798
    %v800 = vrot.slane %v565, %v799
    %v802 = vsel %vm387, %v795, 0
    %v805 = vsel %vm387, %v796, 0
    %807 = vmatprep.subr.mxu0 0.0
    %808 = vmatpush1.msra.mxu0 0.0
    %809 = vmatprep.subr.mxu0 0.0
    %810 = vmatpush1.msra.mxu0 0.0
    %811 = vmatprep.subr.mxu0 0.0
    %812 = vmatpush1.msra.mxu0 0.0
    %813 = vmatprep.subr.mxu0 0.0
    %814 = vmatpush1.msra.mxu0 0.0
    %815 = vmatprep.subr.mxu0 0.0
    %816 = vmatpush1.msra.mxu0 0.0
    %817 = vmatprep.subr.mxu0 0.0
    %818 = vmatpush1.msra.mxu0 0.0
    %819 = vmatprep.subr.mxu0 0.0
    %820 = vmatpush1.msra.mxu0 0.0
    %821 = vmatprep.subr.mxu0 0.0
    %822 = vmatpush1.msra.mxu0 0.0
    %823 = vmatprep.subr.mxu0 0.0
    %824 = vmatpush1.msra.mxu0 %v563
    %825 = vmatprep.subr.mxu0 0.0
    %826 = vmatpush1.msra.mxu0 %v562
    %827 = vmatprep.subr.mxu0 0.0
    %828 = vmatpush1.msra.mxu0 %v561
    %829 = vmatprep.subr.mxu0 0.0
    %830 = vmatpush1.msra.mxu0 %v560
    %831 = vmatprep.subr.mxu0 0.0
    %832 = vmatpush1.msra.mxu0 %v559
    %833 = vmatprep.subr.mxu0 0.0
    %834 = vmatpush1.msra.mxu0 %v558
    %835 = vmatprep.subr.mxu0 0.0
    %836 = vmatpush1.msra.mxu0 %v557
    %837 = vmatprep.subr.mxu0 0.0
    %838 = vmatpush1.msra.mxu0 %v556
    %839 = vmatprep.subr.mxu0 0.0
    %840 = vmatpush2.msra.mxu0 0.0
    %841 = vmatprep.subr.mxu0 0.0
    %842 = vmatpush2.msra.mxu0 0.0
    %843 = vmatprep.subr.mxu0 0.0
    %844 = vmatpush2.msra.mxu0 0.0
    %845 = vmatprep.subr.mxu0 0.0
    %846 = vmatpush2.msra.mxu0 0.0
    %847 = vmatprep.subr.mxu0 0.0
    %848 = vmatpush2.msra.mxu0 0.0
    %849 = vmatprep.subr.mxu0 0.0
    %850 = vmatpush2.msra.mxu0 0.0
    %851 = vmatprep.subr.mxu0 0.0
    %852 = vmatpush2.msra.mxu0 0.0
    %853 = vmatprep.subr.mxu0 0.0
    %854 = vmatpush2.msra.mxu0 0.0
    %855 = vmatprep.subr.mxu0 0.0
    %856 = vmatpush2.msra.mxu0 0.0
    %857 = vmatprep.subr.mxu0 0.0
    %858 = vmatpush2.msra.mxu0 0.0
    %859 = vmatprep.subr.mxu0 0.0
    %860 = vmatpush2.msra.mxu0 0.0
    %861 = vmatprep.subr.mxu0 0.0
    %862 = vmatpush2.msra.mxu0 0.0
    %863 = vmatprep.subr.mxu0 0.0
    %864 = vmatpush2.msra.mxu0 0.0
    %865 = vmatprep.subr.mxu0 0.0
    %866 = vmatpush2.msra.mxu0 0.0
    %867 = vmatprep.subr.mxu0 0.0
    %868 = vmatpush2.msra.mxu0 0.0
    %869 = vmatprep.subr.mxu0 0.0
    %870 = vmatpush2.msra.mxu0 0.0
    %871 = vmatprep.mubr.f32.mxu0 0.0
    %872 = vmatmul.mubr.f32.gmra.mxu0 %v802
    %v873 = vpop.f32.mrf.mxu0
    %v874 = vadd.f32 %v800, %v873
    %v875 = vpop.f32.mrf.mxu0
    %876 = vmatprep.mubr.f32.mxu0 0.0
    %877 = vmatmul.mubr.f32.gmra.mxu0 %v805
    %v878 = vpop.f32.mrf.mxu0
    %v879 = vadd.f32 %v800, %v878
    %v880 = vpop.f32.mrf.mxu0
    %881 = vdwg.mxu0
    %v882 = vsel %vm52, %v874, 0.0
    %883 = vadd.xlane.f32.xlu0 %v882
    %v884 = vpop.xlane.xlu0 %883
    %v885 = vsel %vm52, %v879, 0.0
    %886 = vadd.xlane.f32.xlu0 %v885
    %v887 = vpop.xlane.xlu0 %886
    %v888 = vmul.f32 %v884, %v253
    %v889 = vmul.f32 %v887, %v253
    %v890 = vsub.f32 %v874, %v888
    %v891 = vsub.f32 %v879, %v889
    %v892 = vmul.f32 %v890, %v890
    %v893 = vmul.f32 %v891, %v891
    %v894 = vsel %vm52, %v892, 0.0
    %895 = vadd.xlane.f32.xlu0 %v894
    %v896 = vpop.xlane.xlu0 %895
    %v897 = vsel %vm52, %v893, 0.0
    %898 = vadd.xlane.f32.xlu0 %v897
    %v899 = vpop.xlane.xlu0 %898
    %v900 = vmul.f32 %v896, %v253
    %v901 = vmul.f32 %v899, %v253
    %v902 = vadd.f32 %v900, 1e-05
    %v903 = vadd.f32 %v901, 1e-05
    %v904 = vrsqrt.pop %v902
    %v905 = vrsqrt.pop %v903
    %v906 = vmul.f32 %v890, %v904
    %v907 = vmul.f32 %v891, %v905
    %v908 = vlaneseq
    %v909 = vshrl.u32 %v908, 7
    %v910 = vsub.s32 5, %v909
    %v911 = vrot.slane %v565, %v910
    %v912 = vmul.f32 %v906, %v911
    %v913 = vmul.f32 %v907, %v911
    %v914 = vlaneseq
    %v915 = vshrl.u32 %v914, 7
    %v916 = vsub.s32 6, %v915
    %v917 = vrot.slane %v565, %v916
    %v918 = vadd.f32 %v912, %v917
    %v919 = vadd.f32 %v913, %v917
    %v920 = vsel %vm52, %v918, 0.0
    %921 = vadd.xlane.f32.xlu0 %v920
    %v922 = vpop.xlane.xlu0 %921
    %v923 = vsel %vm52, %v919, 0.0
    %924 = vadd.xlane.f32.xlu0 %v923
    %v925 = vpop.xlane.xlu0 %924
    %v926 = vmul.f32 %v922, %v253
    %v927 = vmul.f32 %v925, %v253
    %v928 = vsub.f32 %v918, %v926
    %v929 = vsub.f32 %v919, %v927
    %v930 = vmul.f32 %v928, %v928
    %v931 = vmul.f32 %v929, %v929
    %v932 = vsel %vm52, %v930, 0.0
    %933 = vadd.xlane.f32.xlu0 %v932
    %v934 = vpop.xlane.xlu0 %933
    %v935 = vsel %vm52, %v931, 0.0
    %936 = vadd.xlane.f32.xlu0 %v935
    %v937 = vpop.xlane.xlu0 %936
    %v938 = vmul.f32 %v934, %v253
    %v939 = vmul.f32 %v937, %v253
    %v940 = vadd.f32 %v938, 1e-05
    %v941 = vadd.f32 %v939, 1e-05
    %v942 = vrsqrt.pop %v940
    %v943 = vrsqrt.pop %v941
    %v944 = vmul.f32 %v928, %v942
    %v945 = vmul.f32 %v929, %v943
    %v946 = vlaneseq
    %v947 = vshrl.u32 %v946, 7
    %v948 = vsub.s32 7, %v947
    %v949 = vrot.slane %v565, %v948
    %v950 = vmul.f32 %v944, %v949
    %v951 = vmul.f32 %v945, %v949
    %v952 = vlaneseq
    %v953 = vshrl.u32 %v952, 7
    %v954 = vsub.s32 0, %v953
    %v955 = vrot.slane %v566, %v954
    %v956 = vadd.f32 %v950, %v955
    %v957 = vadd.f32 %v951, %v955
    %v958 = vadd.f32 %v700, %v956
    %v959 = vadd.f32 %v701, %v957
    %960 = vst.msk [vmem:[#allocation5] sm:$0xff] %vm52, %v958
    %961 = vst.msk [vmem:[#allocation5 + $0x8] sm:$0xff] %vm52, %v959
    // Predicated region
    $region22: #{tpu_custom_call.1} parent=1 // pred_check
      _
    $region23: #{tpu_custom_call.1} parent=1 // pred_check_branch
      %963 = sbr.rel (0) target = $region25
    $region24: #{tpu_custom_call.1} parent=1 // pred_region
      %s965 = ssub.s32 256, 256
      %966 = vsyncadd [#allocation4], %s965
      %s967 = sshll.u32 [#allocation5], 4
      %s968 = int_to_ptr.vmem [resolvable:$true] %s967
      %973 = dma.vmem_to_hbm [thread:$0]  %s968, 256, %s4, [#allocation4], 128, 128, 8
    $region25: #{tpu_custom_call.1} parent=1 // pred_fallthru
      _
    // Predicated region
    $region26: #{tpu_custom_call.1} parent=1 // pred_check
      _
    $region27: #{tpu_custom_call.1} parent=1 // pred_check_branch
      %975 = sbr.rel (0) target = $region29
    $region28: #{tpu_custom_call.1} parent=1 // pred_region
      %976 = dma.done [#allocation4], 256
    $region29: #{tpu_custom_call.1} parent=1 // pred_fallthru
      _
    %977 = vsyncpa [#allocation3], 1
    %978 = vsyncpa [#allocation4], 1

</llo_original>
